<compile_context>
chip_gen: v7x
topology: tpu7x:2x2x1
jax: 0.10.0
libtpu: 0.0.40
codegen_flags: <defaults>
</compile_context>

<pallas_src>
import functools

import jax
import jax.numpy as jnp
from jax.experimental import pallas as pl
from jax.experimental.pallas import tpu as pltpu


def _triplet_loss_kernel(a_ref, p_ref, n_ref, loss_ref, *, margin, batch, tile_b):
    i = pl.program_id(0)

    a = a_ref[...].astype(jnp.float32)
    p = p_ref[...].astype(jnp.float32)
    n = n_ref[...].astype(jnp.float32)

    # Fused: a single lane-reduction instead of two.
    dp = (a - p) * (a - p)
    dn = (a - n) * (a - n)
    diff = jnp.sum(dp - dn, axis=1, keepdims=True)            # (tile_b, 1)

    losses = jnp.maximum(diff + jnp.float32(margin), 0.0)     # F.relu(dp - dn + m)

    # Mask ragged tail rows (the last block may read past B; those reads are
    # garbage — zero their contribution).  jnp.where is a select, so Inf/NaN
    # garbage is harmless.
    row = jax.lax.broadcasted_iota(jnp.int32, (tile_b, 1), 0) + i * tile_b
    losses = jnp.where(row < batch, losses, 0.0)

    loss_ref[...] = losses


def _vmem_capacity_bytes():
    """Per-core VMEM capacity; conservative (v7x-sized) fallback if unknown."""
    try:
        info = pltpu.get_tpu_info()
        cap = getattr(info, "vmem_capacity_bytes", None)
        if cap:
            return int(cap)
    except Exception:
        pass
    return 64 * 1024 * 1024


def _sublane_pack(itemsize):
    """Rows per vreg sublane group: 8 (f32), 16 (bf16), 32 (int8/fp8)."""
    return max(8, 32 // int(itemsize))


def _pick_batch_tile(batch, feat, itemsize, budget_bytes):
    """Largest sublane-aligned batch tile whose pipelined footprint fits budget.

    Footprint per row: 3 inputs x 2 pipeline buffers x feat x itemsize plus the
    (TB,1) f32 output block, which is lane-padded to 128 and double-buffered.
    """
    per_row = 6 * feat * itemsize + 2 * 128 * 4
    pack = _sublane_pack(itemsize)
    tb = max(pack, (budget_bytes // per_row // pack) * pack)
    if tb < batch:
        return tb
    # Whole batch fits in one block: split into two blocks (when it tiles
    # cleanly and is big enough to be worth it) so the "parallel" grid axis
    # spans both v7x TensorCores instead of leaving one idle.
    half = -(-batch // 2)                 # ceil(batch / 2)
    half = -(-half // pack) * pack        # round up to sublane packing
    if half < batch and batch >= 4 * pack:
        return half
    return batch


def triplet_loss_ref(anchor, positive, negative, margin, size_average=True):
    """Pure-JAX reference (also used as the small-problem XLA fallback)."""
    a = anchor.astype(jnp.float32)
    p = positive.astype(jnp.float32)
    n = negative.astype(jnp.float32)
    dp = jnp.sum((a - p) ** 2, axis=1)
    dn = jnp.sum((a - n) ** 2, axis=1)
    losses = jnp.maximum(dp - dn + jnp.float32(margin), 0.0)
    return jnp.mean(losses) if size_average else jnp.sum(losses)


def triplet_loss(anchor, positive, negative, margin, size_average=True,
                 tile_b=None, force_pallas=False):
    """Pallas TPU implementation of TripletLoss.forward. Returns a scalar."""
    assert anchor.shape == positive.shape == negative.shape
    assert anchor.dtype == positive.dtype == negative.dtype
    assert anchor.ndim == 2, "expected (B, D) embeddings"
    B, D = anchor.shape
    itemsize = jnp.dtype(anchor.dtype).itemsize

    # Tiny / lane-sparse regime: D<128 wastes lanes and a few-KiB problem is
    # dominated by pallas_call launch overhead — a plain XLA fusion wins.
    small = (D < 128) or (3 * B * D * itemsize < (1 << 20))
    if small and not force_pallas:
        return triplet_loss_ref(anchor, positive, negative, margin, size_average)

    cap = _vmem_capacity_bytes()
    budget = int(cap * 0.70)          # ~45 MiB on v7x, ~90 MiB on v5e/v6e
    pack = _sublane_pack(itemsize)

    if tile_b is None:
        TB = _pick_batch_tile(B, D, itemsize, budget)
    else:
        # Validate user-supplied tile: must respect sublane packing unless it
        # covers the whole (possibly unaligned) batch in a single block.
        TB = int(tile_b)
        TB = B if TB >= B else max(pack, (TB // pack) * pack)

    num_blocks = pl.cdiv(B, TB)

    # Real pipelined VMEM footprint -> explicit scoped-VMEM limit (+headroom),
    # never exceeding the chip's physical capacity.
    footprint = 6 * TB * D * itemsize + 2 * TB * 128 * 4
    vmem_limit = max(footprint + (8 << 20), 32 << 20)
    vmem_limit = min(vmem_limit, max(cap - (2 << 20), footprint + (2 << 20)))

    kernel = functools.partial(
        _triplet_loss_kernel, margin=float(margin), batch=B, tile_b=TB
    )

    losses = pl.pallas_call(
        kernel,
        out_shape=jax.ShapeDtypeStruct((B, 1), jnp.float32),
        grid=(num_blocks,),
        in_specs=[
            pl.BlockSpec((TB, D), lambda i: (i, 0)),
            pl.BlockSpec((TB, D), lambda i: (i, 0)),
            pl.BlockSpec((TB, D), lambda i: (i, 0)),
        ],
        out_specs=pl.BlockSpec((TB, 1), lambda i: (i, 0)),
        compiler_params=pltpu.CompilerParams(
            dimension_semantics=("parallel",),
            vmem_limit_bytes=int(vmem_limit),
        ),
        cost_estimate=pl.CostEstimate(
            flops=6 * B * D + 2 * B,
            transcendentals=0,
            bytes_accessed=3 * B * D * itemsize + B * 4,
        ),
    )(anchor, positive, negative)

    total = jnp.sum(losses)
    if size_average:
        return total / jnp.float32(B)   # divide by the true B, not padded B
    return total


if __name__ == "__main__":
    margin = 1.0

    # --- Case 1: module-typical tiny embeddings (D < 128) -> XLA fallback. ---
    k_a, k_p, k_n = jax.random.split(jax.random.PRNGKey(0), 3)
    B1, D1 = 8, 32
    a1 = jax.random.normal(k_a, (B1, D1), dtype=jnp.float32)
    p1 = jax.random.normal(k_p, (B1, D1), dtype=jnp.float32)
    n1 = jax.random.normal(k_n, (B1, D1), dtype=jnp.float32)
    out1_mean = triplet_loss(a1, p1, n1, margin, size_average=True)
    out1_sum = triplet_loss(a1, p1, n1, margin, size_average=False)
    jax.block_until_ready((out1_mean, out1_sum))
    assert jnp.allclose(out1_mean, triplet_loss_ref(a1, p1, n1, margin, True),
                        rtol=1e-5, atol=1e-5)
    assert jnp.allclose(out1_sum, triplet_loss_ref(a1, p1, n1, margin, False),
                        rtol=1e-5, atol=1e-5)

    # --- Case 2: Pallas path, explicit tile, ragged tail (300 % 128 != 0). ---
    k_a2, k_p2, k_n2 = jax.random.split(jax.random.PRNGKey(1), 3)
    B2, D2 = 300, 256
    a2 = jax.random.normal(k_a2, (B2, D2), dtype=jnp.float32)
    p2 = jax.random.normal(k_p2, (B2, D2), dtype=jnp.float32)
    n2 = jax.random.normal(k_n2, (B2, D2), dtype=jnp.float32)
    out2_mean = triplet_loss(a2, p2, n2, margin, True, tile_b=128, force_pallas=True)
    out2_sum = triplet_loss(a2, p2, n2, margin, False, tile_b=128, force_pallas=True)
    jax.block_until_ready((out2_mean, out2_sum))
    assert jnp.allclose(out2_mean, triplet_loss_ref(a2, p2, n2, margin, True),
                        rtol=1e-5, atol=1e-5)
    assert jnp.allclose(out2_sum, triplet_loss_ref(a2, p2, n2, margin, False),
                        rtol=1e-4, atol=1e-4)

    # --- Case 3: auto tiling (>=2 blocks for v7x) + bf16 embeddings in HBM. ---
    k_a3, k_p3, k_n3 = jax.random.split(jax.random.PRNGKey(2), 3)
    B3, D3 = 192, 512
    a3 = jax.random.normal(k_a3, (B3, D3), dtype=jnp.float32).astype(jnp.bfloat16)
    p3 = jax.random.normal(k_p3, (B3, D3), dtype=jnp.float32).astype(jnp.bfloat16)
    n3 = jax.random.normal(k_n3, (B3, D3), dtype=jnp.float32).astype(jnp.bfloat16)
    out3_mean = triplet_loss(a3, p3, n3, margin, True, force_pallas=True)
    out3_sum = triplet_loss(a3, p3, n3, margin, False, force_pallas=True)
    jax.block_until_ready((out3_mean, out3_sum))
    assert jnp.allclose(out3_mean, triplet_loss_ref(a3, p3, n3, margin, True),
                        rtol=1e-4, atol=1e-4)
    assert jnp.allclose(out3_sum, triplet_loss_ref(a3, p3, n3, margin, False),
                        rtol=1e-3, atol=1e-3)

    print("KERNEL_OK")
</pallas_src>

<mosaic_0001>
module attributes {stable_mosaic.version = 11 : i64} {
  func.func @_triplet_loss_kernel(%arg0: i32, %arg1: memref<128x256xf32, #tpu.memory_space<vmem>>, %arg2: memref<128x256xf32, #tpu.memory_space<vmem>>, %arg3: memref<128x256xf32, #tpu.memory_space<vmem>>, %arg4: memref<128x1xf32, #tpu.memory_space<vmem>>) attributes {dimension_semantics = [#tpu.dimension_semantics<parallel>], iteration_bounds = array<i64: 3>, scalar_prefetch = 0 : i64, scratch_operands = 0 : i64, tpu.core_type = #tpu.core_type<tc>, window_params = [{transform_indices = @transform_0, window_bounds = array<i64: 128, 256>}, {transform_indices = @transform_1, window_bounds = array<i64: 128, 256>}, {transform_indices = @transform_2, window_bounds = array<i64: 128, 256>}, {transform_indices = @transform_3, window_bounds = array<i64: 128, 1>}]} {
    %c0 = arith.constant 0 : index
    %c0_0 = arith.constant 0 : index
    %0 = vector.load %arg1[%c0, %c0_0] : memref<128x256xf32, #tpu.memory_space<vmem>>, vector<128x256xf32>
    %c0_1 = arith.constant 0 : index
    %c0_2 = arith.constant 0 : index
    %1 = vector.load %arg2[%c0_1, %c0_2] : memref<128x256xf32, #tpu.memory_space<vmem>>, vector<128x256xf32>
    %c0_3 = arith.constant 0 : index
    %c0_4 = arith.constant 0 : index
    %2 = vector.load %arg3[%c0_3, %c0_4] : memref<128x256xf32, #tpu.memory_space<vmem>>, vector<128x256xf32>
    %3 = arith.subf %0, %1 : vector<128x256xf32>
    %4 = arith.subf %0, %1 : vector<128x256xf32>
    %5 = arith.mulf %3, %4 : vector<128x256xf32>
    %6 = arith.subf %0, %2 : vector<128x256xf32>
    %7 = arith.subf %0, %2 : vector<128x256xf32>
    %8 = arith.mulf %6, %7 : vector<128x256xf32>
    %9 = arith.subf %5, %8 : vector<128x256xf32>
    %cst = arith.constant dense<0.000000e+00> : vector<128xf32>
    %10 = vector.multi_reduction <add>, %9, %cst [1] : vector<128x256xf32> to vector<128xf32>
    %11 = vector.shape_cast %10 : vector<128xf32> to vector<128x1xf32>
    %cst_5 = arith.constant 1.000000e+00 : f32
    %12 = vector.broadcast %cst_5 : f32 to vector<128x1xf32>
    %13 = arith.addf %11, %12 : vector<128x1xf32>
    %cst_6 = arith.constant 0.000000e+00 : f32
    %14 = vector.broadcast %cst_6 : f32 to vector<128x1xf32>
    %15 = arith.maximumf %13, %14 : vector<128x1xf32>
    %16 = tpu.iota {dimensions = array<i32: 0>} : vector<128x1xi32>
    %c128_i32 = arith.constant 128 : i32
    %17 = arith.muli %arg0, %c128_i32 : i32
    %18 = vector.broadcast %17 : i32 to vector<128x1xi32>
    %19 = arith.addi %16, %18 : vector<128x1xi32>
    %c300_i32 = arith.constant 300 : i32
    %20 = vector.broadcast %c300_i32 : i32 to vector<128x1xi32>
    %21 = arith.cmpi slt, %19, %20 : vector<128x1xi32>
    %cst_7 = arith.constant 0.000000e+00 : f32
    %22 = vector.broadcast %cst_7 : f32 to vector<128x1xf32>
    %23 = arith.select %21, %15, %22 : vector<128x1xi1>, vector<128x1xf32>
    %c0_8 = arith.constant 0 : index
    %c0_9 = arith.constant 0 : index
    %24 = vector.load %arg4[%c0_8, %c0_9] : memref<128x1xf32, #tpu.memory_space<vmem>>, vector<128x1xf32>
    tpu.vector_store %arg4[%c0_8, %c0_9], %23 {strides = array<i32>} : memref<128x1xf32, #tpu.memory_space<vmem>>, vector<128x1xf32>,
    return
  }
  func.func @transform_0(%arg0: i32) -> (i32, i32) {
    %c0_i32 = arith.constant 0 : i32
    %c0_i32_0 = arith.constant 0 : i32
    return %arg0, %c0_i32 : i32, i32
  }
  func.func @transform_1(%arg0: i32) -> (i32, i32) {
    %c0_i32 = arith.constant 0 : i32
    %c0_i32_0 = arith.constant 0 : i32
    return %arg0, %c0_i32 : i32, i32
  }
  func.func @transform_2(%arg0: i32) -> (i32, i32) {
    %c0_i32 = arith.constant 0 : i32
    %c0_i32_0 = arith.constant 0 : i32
    return %arg0, %c0_i32 : i32, i32
  }
  func.func @transform_3(%arg0: i32) -> (i32, i32) {
    %c0_i32 = arith.constant 0 : i32
    %c0_i32_0 = arith.constant 0 : i32
    return %arg0, %c0_i32 : i32, i32
  }
}

</mosaic_0001>

<llo_original>
// kernel: tpu_custom_call.1
$region0: #{tpu_custom_call.1}
  #allocation0 [shape = 'u32[]', space=smem, size = 0x4, offset = 0x4, fixed_abs, tag = 'smem constant byte address 0x4 - core index']
  #allocation1 [shape = 'u32[144,128]{1,0:T(1,128)}', space=vmem, size = 0x12000, scoped, tag = 'internal scratch']
  %s0 = inlined_call_operand.hbm [shape: f32[300,256], index: 0, kind: input, shape index: {}]
  %s1 = inlined_call_operand.hbm [shape: f32[300,256], index: 1, kind: input, shape index: {}]
  %s2 = inlined_call_operand.hbm [shape: f32[300,256], index: 2, kind: input, shape index: {}]
  %s3 = inlined_call_operand.vmem [shape: f32[300,1], index: 3, kind: output, shape index: {}]
  %s4 = sld [smem:[#allocation0]]
  $region105: #{tpu_custom_call.1} parent=0
    _
  %s6 = ssub.s32 1, %s4
  %s7 = scalar_select 0, %s6, %s4
  $region1: #{tpu_custom_call.1} parent=0
    #allocation2 [shape = 'u8[262144]{0}', space=vmem, size = 0x40000, scoped, tag = 'input window, operand 0']
    #allocation3 [shape = 's32[2]{0}', space=sflag, size = 0x8, scoped, tag = 'scoped memory for tpu_custom_call.1']
    #allocation4 [shape = 'u8[262144]{0}', space=vmem, size = 0x40000, scoped, tag = 'input window, operand 1']
    #allocation5 [shape = 's32[2]{0}', space=sflag, size = 0x8, scoped, tag = 'scoped memory for tpu_custom_call.1']
    #allocation6 [shape = 'u8[262144]{0}', space=vmem, size = 0x40000, scoped, tag = 'input window, operand 2']
    #allocation7 [shape = 'u8[131072]{0}', space=vmem, size = 0x20000, scoped, tag = 'output window, operand 0']
    %8 = vsyncpa [#allocation3], 0
    %s9 = scalar_lea.sflag [#allocation3], 1
    %10 = vsyncpa %s9, 0
    %11 = vsyncpa [#allocation5], 0
    %s12 = scalar_lea.sflag [#allocation5], 1
    %13 = vsyncpa %s12, 0
    loop: start=0, step=1, limit=5
    $region2: #{tpu_custom_call.1} parent=1 // loop_pre_header
      _
    $region3: #{tpu_custom_call.1} parent=1 // loop_header
      %s15 = sphi 0, %s19
      %p16 = scmp.ge.s32.totalorder %s15, 5
      %s25 = sphi 0, %s27
      %s28 = sphi 0, %s25
      %s29 = sphi 0, %s28
      %s45 = sphi 0, %s29
      %s51 = sphi 0, %s53
      %s54 = sphi 0, %s51
      %s55 = sphi 0, %s54
      %s71 = sphi 0, %s55
      %s77 = sphi 0, %s79
      %s80 = sphi 0, %s77
      %s81 = sphi 0, %s80
      %s97 = sphi 0, %s81
      %s103 = sphi 0, %s105
      %s106 = sphi 0, %s103
      %s107 = sphi 0, %s106
      %s123 = sphi 0, %s107
    $region4: #{tpu_custom_call.1} parent=1 // loop_header_branch
      %18 = sbr.rel (%p16) target = $region8
    $region5: #{tpu_custom_call.1} parent=1 // loop_body
      %s20 = ssub.s32 %s15, 1
      %s21 = ssub.s32 %s15, 2
      %s22 = sadd.s32 %s15, 1
      %s23 = ssub.s32 %s15, %s22
      %p24 = scmp.eq.s32.totalorder %s23, 0
      %s26 = sadd.s32 %s25, 1
      %s27 = scalar_select %p24, %s25, %s26
      %p30 = pneg %p24
      %p31 = scmp.eq.s32.totalorder %s15, 2
      %p32 = por %p30, %p31
      %p33 = scmp.ne.s32.totalorder %s25, %s28
      %p34 = scmp.eq.s32.totalorder %s15, 0
      %p35 = por %p33, %p34
      %p36 = scmp.ne.s32.totalorder %s25, %s28
      %p37 = scmp.eq.s32.totalorder %s20, 2
      %p38 = por %p36, %p37
      %p39 = scmp.ne.s32.totalorder %s28, %s29
      %p40 = scmp.eq.s32.totalorder %s20, 0
      %p41 = por %p39, %p40
      %p42 = scmp.ne.s32.totalorder %s28, %s29
      %p43 = scmp.eq.s32.totalorder %s21, 2
      %p44 = por %p42, %p43
      %p46 = scmp.ne.s32.totalorder %s29, %s45
      %p47 = scmp.eq.s32.totalorder %s21, 0
      %p48 = por %p46, %p47
      %s49 = ssub.s32 %s15, %s22
      %p50 = scmp.eq.s32.totalorder %s49, 0
      %s52 = sadd.s32 %s51, 1
      %s53 = scalar_select %p50, %s51, %s52
      %p56 = pneg %p50
      %p57 = scmp.eq.s32.totalorder %s15, 2
      %p58 = por %p56, %p57
      %p59 = scmp.ne.s32.totalorder %s51, %s54
      %p60 = scmp.eq.s32.totalorder %s15, 0
      %p61 = por %p59, %p60
      %p62 = scmp.ne.s32.totalorder %s51, %s54
      %p63 = scmp.eq.s32.totalorder %s20, 2
      %p64 = por %p62, %p63
      %p65 = scmp.ne.s32.totalorder %s54, %s55
      %p66 = scmp.eq.s32.totalorder %s20, 0
      %p67 = por %p65, %p66
      %p68 = scmp.ne.s32.totalorder %s54, %s55
      %p69 = scmp.eq.s32.totalorder %s21, 2
      %p70 = por %p68, %p69
      %p72 = scmp.ne.s32.totalorder %s55, %s71
      %p73 = scmp.eq.s32.totalorder %s21, 0
      %p74 = por %p72, %p73
      %s75 = ssub.s32 %s15, %s22
      %p76 = scmp.eq.s32.totalorder %s75, 0
      %s78 = sadd.s32 %s77, 1
      %s79 = scalar_select %p76, %s77, %s78
      %p82 = pneg %p76
      %p83 = scmp.eq.s32.totalorder %s15, 2
      %p84 = por %p82, %p83
      %p85 = scmp.ne.s32.totalorder %s77, %s80
      %p86 = scmp.eq.s32.totalorder %s15, 0
      %p87 = por %p85, %p86
      %p88 = scmp.ne.s32.totalorder %s77, %s80
      %p89 = scmp.eq.s32.totalorder %s20, 2
      %p90 = por %p88, %p89
      %p91 = scmp.ne.s32.totalorder %s80, %s81
      %p92 = scmp.eq.s32.totalorder %s20, 0
      %p93 = por %p91, %p92
      %p94 = scmp.ne.s32.totalorder %s80, %s81
      %p95 = scmp.eq.s32.totalorder %s21, 2
      %p96 = por %p94, %p95
      %p98 = scmp.ne.s32.totalorder %s81, %s97
      %p99 = scmp.eq.s32.totalorder %s21, 0
      %p100 = por %p98, %p99
      %s101 = ssub.s32 %s15, %s22
      %p102 = scmp.eq.s32.totalorder %s101, 0
      %s104 = sadd.s32 %s103, 1
      %s105 = scalar_select %p102, %s103, %s104
      %p108 = pneg %p102
      %p109 = scmp.eq.s32.totalorder %s15, 2
      %p110 = por %p108, %p109
      %p111 = scmp.ne.s32.totalorder %s103, %s106
      %p112 = scmp.eq.s32.totalorder %s15, 0
      %p113 = por %p111, %p112
      %p114 = scmp.ne.s32.totalorder %s103, %s106
      %p115 = scmp.eq.s32.totalorder %s20, 2
      %p116 = por %p114, %p115
      %p117 = scmp.ne.s32.totalorder %s106, %s107
      %p118 = scmp.eq.s32.totalorder %s20, 0
      %p119 = por %p117, %p118
      %p120 = scmp.ne.s32.totalorder %s106, %s107
      %p121 = scmp.eq.s32.totalorder %s21, 2
      %p122 = por %p120, %p121
      %p124 = scmp.ne.s32.totalorder %s107, %s123
      %p125 = scmp.eq.s32.totalorder %s21, 0
      %p126 = por %p124, %p125
      %p127 = scmp.le.s32.totalorder 1, %s15
      %p128 = scmp.lt.s32.totalorder %s15, 4
      %p129 = pnand %p127, %p128
      %p130 = pneg %p129
      // Predicated region
      $region9: #{tpu_custom_call.1} parent=5 // pred_check
        _
      $region10: #{tpu_custom_call.1} parent=5 // pred_check_branch
        %132 = sbr.rel (%p129) target = $region12
      $region11: #{tpu_custom_call.1} parent=5 // pred_region
        %s133 = ssub.s32 %s15, 1
      $region12: #{tpu_custom_call.1} parent=5 // pred_fallthru
        _
      %p134 = scmp.lt.s32.totalorder %s15, 3
      // Predicated region
      $region13: #{tpu_custom_call.1} parent=5 // pred_check
        %p135 = pneg %p134
      $region14: #{tpu_custom_call.1} parent=5 // pred_check_branch
        %137 = sbr.rel (%p135) target = $region16
      $region15: #{tpu_custom_call.1} parent=5 // pred_region
        // Predicated region
        $region17: #{tpu_custom_call.1} parent=15 // pred_check
          %p138 = pneg %p35
        $region18: #{tpu_custom_call.1} parent=15 // pred_check_branch
          %140 = sbr.rel (%p138) target = $region20
        $region19: #{tpu_custom_call.1} parent=15 // pred_region
          %s141 = sand.u32 %s25, 1
          %s142 = scalar_lea.sflag [#allocation3], %s141
          %s143 = sand.u32 %s25, 1
          %s144 = smul.addr %s143, 256
          %s145 = scalar_lea.vmem [#allocation2], %s144
          %s146 = smul.u32 16, %s15
          %s147 = ssub.s32 38, %s146
          %p148 = scmp.lt.s32.totalorder %s147, 16
          %s149 = scalar_select %p148, %s147, 16
          %s150 = smul.u32 128, %s149
          %s151 = smul.u32 %s150, 2
          %s153 = ssub.s32 4096, %s151
          %154 = vsyncadd %s142, %s153
          %p155 = scmp.ne.s32.totalorder 0, %s151
          %s156 = smul.addr %s146, 2
          %s157 = smul.addr %s156, 128
          %s158 = scalar_lea.hbm %s0, %s157
          %s159 = smul.u32 16, %s149
          %s160 = sshll.u32 %s145, 4
          %s161 = int_to_ptr.vmem [resolvable:$true] %s160
          %s162 = sshll.u32 %s159, 4
          %166 = dma.hbm_to_vmem [thread:$0]  (%p155), %s158, %s162, %s161, %s142, 256, 256, 16
        $region20: #{tpu_custom_call.1} parent=15 // pred_fallthru
          _
        // Predicated region
        $region21: #{tpu_custom_call.1} parent=15 // pred_check
          %p167 = pneg %p61
        $region22: #{tpu_custom_call.1} parent=15 // pred_check_branch
          %169 = sbr.rel (%p167) target = $region24
        $region23: #{tpu_custom_call.1} parent=15 // pred_region
          %s170 = sand.u32 %s15, 1
          %s171 = scalar_lea.sflag [#allocation5], %s170
          %s172 = sand.u32 %s51, 1
          %s173 = smul.addr %s172, 256
          %s174 = scalar_lea.vmem [#allocation4], %s173
          %s175 = smul.u32 16, %s15
          %s176 = ssub.s32 38, %s175
          %p177 = scmp.lt.s32.totalorder %s176, 16
          %s178 = scalar_select %p177, %s176, 16
          %s179 = smul.u32 128, %s178
          %s180 = smul.u32 %s179, 2
          %s182 = ssub.s32 4096, %s180
          %183 = vsyncadd %s171, %s182
          %p184 = scmp.ne.s32.totalorder 0, %s180
          %s185 = smul.addr %s175, 2
          %s186 = smul.addr %s185, 128
          %s187 = scalar_lea.hbm %s1, %s186
          %s188 = smul.u32 16, %s178
          %s189 = sshll.u32 %s174, 4
          %s190 = int_to_ptr.vmem [resolvable:$true] %s189
          %s191 = sshll.u32 %s188, 4
          %195 = dma.hbm_to_vmem [thread:$0]  (%p184), %s187, %s191, %s190, %s171, 256, 256, 16
        $region24: #{tpu_custom_call.1} parent=15 // pred_fallthru
          _
        // Predicated region
        $region25: #{tpu_custom_call.1} parent=15 // pred_check
          %p196 = pneg %p87
        $region26: #{tpu_custom_call.1} parent=15 // pred_check_branch
          %198 = sbr.rel (%p196) target = $region28
        $region27: #{tpu_custom_call.1} parent=15 // pred_region
          %s199 = sand.u32 %s15, 1
          %s200 = scalar_lea.sflag [#allocation5], %s199
          %s201 = sand.u32 %s77, 1
          %s202 = smul.addr %s201, 256
          %s203 = scalar_lea.vmem [#allocation6], %s202
          %s204 = smul.u32 16, %s15
          %s205 = ssub.s32 38, %s204
          %p206 = scmp.lt.s32.totalorder %s205, 16
          %s207 = scalar_select %p206, %s205, 16
          %s208 = smul.u32 128, %s207
          %s209 = smul.u32 %s208, 2
          %s211 = ssub.s32 4096, %s209
          %212 = vsyncadd %s200, %s211
          %p213 = scmp.ne.s32.totalorder 0, %s209
          %s214 = smul.addr %s204, 2
          %s215 = smul.addr %s214, 128
          %s216 = scalar_lea.hbm %s2, %s215
          %s217 = smul.u32 16, %s207
          %s218 = sshll.u32 %s203, 4
          %s219 = int_to_ptr.vmem [resolvable:$true] %s218
          %s220 = sshll.u32 %s217, 4
          %224 = dma.hbm_to_vmem [thread:$0]  (%p213), %s216, %s220, %s219, %s200, 256, 256, 16
        $region28: #{tpu_custom_call.1} parent=15 // pred_fallthru
          _
      $region16: #{tpu_custom_call.1} parent=5 // pred_fallthru
        _
      %p225 = scmp.le.s32.totalorder 1, %s15
      %p226 = scmp.lt.s32.totalorder %s15, 4
      %p227 = pnand %p225, %p226
      %p228 = pneg %p227
      // Predicated region
      $region29: #{tpu_custom_call.1} parent=5 // pred_check
        _
      $region30: #{tpu_custom_call.1} parent=5 // pred_check_branch
        %230 = sbr.rel (%p227) target = $region32
      $region31: #{tpu_custom_call.1} parent=5 // pred_region
        %s231 = ssub.s32 %s15, 1
        %s232 = sand.u32 %s28, 1
        %s233 = scalar_lea.sflag [#allocation3], %s232
        %s234 = sand.u32 %s28, 1
        %s235 = smul.addr %s234, 256
        %s236 = scalar_lea.vmem [#allocation2], %s235
        // Predicated region
        $region33: #{tpu_custom_call.1} parent=31 // pred_check
          %p237 = pneg %p41
        $region34: #{tpu_custom_call.1} parent=31 // pred_check_branch
          %239 = sbr.rel (%p237) target = $region36
        $region35: #{tpu_custom_call.1} parent=31 // pred_region
          %240 = dma.done %s233, 4096
        $region36: #{tpu_custom_call.1} parent=31 // pred_fallthru
          _
        %s241 = sand.u32 %s20, 1
        %s242 = scalar_lea.sflag [#allocation5], %s241
        %s243 = sand.u32 %s54, 1
        %s244 = smul.addr %s243, 256
        %s245 = scalar_lea.vmem [#allocation4], %s244
        // Predicated region
        $region37: #{tpu_custom_call.1} parent=31 // pred_check
          %p246 = pneg %p67
        $region38: #{tpu_custom_call.1} parent=31 // pred_check_branch
          %248 = sbr.rel (%p246) target = $region40
        $region39: #{tpu_custom_call.1} parent=31 // pred_region
          %249 = dma.done %s242, 4096
        $region40: #{tpu_custom_call.1} parent=31 // pred_fallthru
          _
        %s250 = sand.u32 %s20, 1
        %s251 = scalar_lea.sflag [#allocation5], %s250
        %s252 = sand.u32 %s80, 1
        %s253 = smul.addr %s252, 256
        %s254 = scalar_lea.vmem [#allocation6], %s253
        // Predicated region
        $region41: #{tpu_custom_call.1} parent=31 // pred_check
          %p255 = pneg %p93
        $region42: #{tpu_custom_call.1} parent=31 // pred_check_branch
          %257 = sbr.rel (%p255) target = $region44
        $region43: #{tpu_custom_call.1} parent=31 // pred_region
          %258 = dma.done %s251, 4096
        $region44: #{tpu_custom_call.1} parent=31 // pred_fallthru
          _
        %s259 = sand.u32 %s28, 1
        %s260 = scalar_lea.sflag [#allocation3], %s259
        %s261 = sand.u32 %s28, 1
        %s262 = smul.addr %s261, 256
        %s263 = scalar_lea.vmem [#allocation2], %s262
        %p264 = pneg %p41
        %p265 = pneg %p38
        %s266 = sand.u32 %s20, 1
        %s267 = scalar_lea.sflag [#allocation5], %s266
        %s268 = sand.u32 %s54, 1
        %s269 = smul.addr %s268, 256
        %s270 = scalar_lea.vmem [#allocation4], %s269
        %p271 = pneg %p67
        %p272 = pneg %p64
        %s273 = sand.u32 %s20, 1
        %s274 = scalar_lea.sflag [#allocation5], %s273
        %s275 = sand.u32 %s80, 1
        %s276 = smul.addr %s275, 256
        %s277 = scalar_lea.vmem [#allocation6], %s276
        %p278 = pneg %p93
        %p279 = pneg %p90
        %p280 = pneg %p119
        %p281 = pneg %p116
        %s282 = sand.u32 %s106, 1
        %s283 = sand.u32 %s106, 1
        %s284 = smul.addr %s283, 128
        %s285 = scalar_lea.vmem [#allocation7], %s284
        %s286 = smul.u32 16, %s20
        %s287 = ssub.s32 38, %s286
        %p288 = scmp.lt.s32.totalorder %s287, 16
        %s289 = scalar_select %p288, %s287, 16
        %s290 = smul.u32 128, %s289
        %s291 = smul.u32 %s290, 2
        %s292 = smul.u32 16, %s20
        %s293 = ssub.s32 38, %s292
        %p294 = scmp.lt.s32.totalorder %s293, 16
        %s295 = scalar_select %p294, %s293, 16
        %s296 = smul.u32 128, %s295
        %s297 = smul.u32 %s296, 2
        %s298 = smul.u32 16, %s20
        %s299 = ssub.s32 38, %s298
        %p300 = scmp.lt.s32.totalorder %s299, 16
        %s301 = scalar_select %p300, %s299, 16
        %s302 = smul.u32 128, %s301
        %s303 = smul.u32 %s302, 2
        %s304 = smul.u32 16, %s20
        %s305 = ssub.s32 38, %s304
        %p306 = scmp.lt.s32.totalorder %s305, 16
        %s307 = scalar_select %p306, %s305, 16
        %s308 = smul.u32 128, %s307
        %v309 = vld [vmem:[%s236] sm:$0xff]
        %v310 = vld [vmem:[%s236 + $0x8] sm:$0xff]
        %v311 = vld [vmem:[%s236 + $0x10] sm:$0xff]
        %v312 = vld [vmem:[%s236 + $0x18] sm:$0xff]
        %v313 = vld [vmem:[%s236 + $0x20] sm:$0xff]
        %v314 = vld [vmem:[%s236 + $0x28] sm:$0xff]
        %v315 = vld [vmem:[%s236 + $0x30] sm:$0xff]
        %v316 = vld [vmem:[%s236 + $0x38] sm:$0xff]
        %v317 = vld [vmem:[%s236 + $0x40] sm:$0xff]
        %v318 = vld [vmem:[%s236 + $0x48] sm:$0xff]
        %v319 = vld [vmem:[%s236 + $0x50] sm:$0xff]
        %v320 = vld [vmem:[%s236 + $0x58] sm:$0xff]
        %v321 = vld [vmem:[%s236 + $0x60] sm:$0xff]
        %v322 = vld [vmem:[%s236 + $0x68] sm:$0xff]
        %v323 = vld [vmem:[%s236 + $0x70] sm:$0xff]
        %v324 = vld [vmem:[%s236 + $0x78] sm:$0xff]
        %v325 = vld [vmem:[%s236 + $0x80] sm:$0xff]
        %v326 = vld [vmem:[%s236 + $0x88] sm:$0xff]
        %v327 = vld [vmem:[%s236 + $0x90] sm:$0xff]
        %v328 = vld [vmem:[%s236 + $0x98] sm:$0xff]
        %v329 = vld [vmem:[%s236 + $0xa0] sm:$0xff]
        %v330 = vld [vmem:[%s236 + $0xa8] sm:$0xff]
        %v331 = vld [vmem:[%s236 + $0xb0] sm:$0xff]
        %v332 = vld [vmem:[%s236 + $0xb8] sm:$0xff]
        %v333 = vld [vmem:[%s236 + $0xc0] sm:$0xff]
        %v334 = vld [vmem:[%s236 + $0xc8] sm:$0xff]
        %v335 = vld [vmem:[%s236 + $0xd0] sm:$0xff]
        %v336 = vld [vmem:[%s236 + $0xd8] sm:$0xff]
        %v337 = vld [vmem:[%s236 + $0xe0] sm:$0xff]
        %v338 = vld [vmem:[%s236 + $0xe8] sm:$0xff]
        %v339 = vld [vmem:[%s236 + $0xf0] sm:$0xff]
        %v340 = vld [vmem:[%s236 + $0xf8] sm:$0xff]
        %v341 = vld [vmem:[%s245] sm:$0xff]
        %v342 = vld [vmem:[%s245 + $0x8] sm:$0xff]
        %v343 = vld [vmem:[%s245 + $0x10] sm:$0xff]
        %v344 = vld [vmem:[%s245 + $0x18] sm:$0xff]
        %v345 = vld [vmem:[%s245 + $0x20] sm:$0xff]
        %v346 = vld [vmem:[%s245 + $0x28] sm:$0xff]
        %v347 = vld [vmem:[%s245 + $0x30] sm:$0xff]
        %v348 = vld [vmem:[%s245 + $0x38] sm:$0xff]
        %v349 = vld [vmem:[%s245 + $0x40] sm:$0xff]
        %v350 = vld [vmem:[%s245 + $0x48] sm:$0xff]
        %v351 = vld [vmem:[%s245 + $0x50] sm:$0xff]
        %v352 = vld [vmem:[%s245 + $0x58] sm:$0xff]
        %v353 = vld [vmem:[%s245 + $0x60] sm:$0xff]
        %v354 = vld [vmem:[%s245 + $0x68] sm:$0xff]
        %v355 = vld [vmem:[%s245 + $0x70] sm:$0xff]
        %v356 = vld [vmem:[%s245 + $0x78] sm:$0xff]
        %v357 = vld [vmem:[%s245 + $0x80] sm:$0xff]
        %v358 = vld [vmem:[%s245 + $0x88] sm:$0xff]
        %v359 = vld [vmem:[%s245 + $0x90] sm:$0xff]
        %v360 = vld [vmem:[%s245 + $0x98] sm:$0xff]
        %v361 = vld [vmem:[%s245 + $0xa0] sm:$0xff]
        %v362 = vld [vmem:[%s245 + $0xa8] sm:$0xff]
        %v363 = vld [vmem:[%s245 + $0xb0] sm:$0xff]
        %v364 = vld [vmem:[%s245 + $0xb8] sm:$0xff]
        %v365 = vld [vmem:[%s245 + $0xc0] sm:$0xff]
        %v366 = vld [vmem:[%s245 + $0xc8] sm:$0xff]
        %v367 = vld [vmem:[%s245 + $0xd0] sm:$0xff]
        %v368 = vld [vmem:[%s245 + $0xd8] sm:$0xff]
        %v369 = vld [vmem:[%s245 + $0xe0] sm:$0xff]
        %v370 = vld [vmem:[%s245 + $0xe8] sm:$0xff]
        %v371 = vld [vmem:[%s245 + $0xf0] sm:$0xff]
        %v372 = vld [vmem:[%s245 + $0xf8] sm:$0xff]
        %v373 = vld [vmem:[%s254] sm:$0xff]
        %v374 = vld [vmem:[%s254 + $0x8] sm:$0xff]
        %v375 = vld [vmem:[%s254 + $0x10] sm:$0xff]
        %v376 = vld [vmem:[%s254 + $0x18] sm:$0xff]
        %v377 = vld [vmem:[%s254 + $0x20] sm:$0xff]
        %v378 = vld [vmem:[%s254 + $0x28] sm:$0xff]
        %v379 = vld [vmem:[%s254 + $0x30] sm:$0xff]
        %v380 = vld [vmem:[%s254 + $0x38] sm:$0xff]
        %v381 = vld [vmem:[%s254 + $0x40] sm:$0xff]
        %v382 = vld [vmem:[%s254 + $0x48] sm:$0xff]
        %v383 = vld [vmem:[%s254 + $0x50] sm:$0xff]
        %v384 = vld [vmem:[%s254 + $0x58] sm:$0xff]
        %v385 = vld [vmem:[%s254 + $0x60] sm:$0xff]
        %v386 = vld [vmem:[%s254 + $0x68] sm:$0xff]
        %v387 = vld [vmem:[%s254 + $0x70] sm:$0xff]
        %v388 = vld [vmem:[%s254 + $0x78] sm:$0xff]
        %v389 = vld [vmem:[%s254 + $0x80] sm:$0xff]
        %v390 = vld [vmem:[%s254 + $0x88] sm:$0xff]
        %v391 = vld [vmem:[%s254 + $0x90] sm:$0xff]
        %v392 = vld [vmem:[%s254 + $0x98] sm:$0xff]
        %v393 = vld [vmem:[%s254 + $0xa0] sm:$0xff]
        %v394 = vld [vmem:[%s254 + $0xa8] sm:$0xff]
        %v395 = vld [vmem:[%s254 + $0xb0] sm:$0xff]
        %v396 = vld [vmem:[%s254 + $0xb8] sm:$0xff]
        %v397 = vld [vmem:[%s254 + $0xc0] sm:$0xff]
        %v398 = vld [vmem:[%s254 + $0xc8] sm:$0xff]
        %v399 = vld [vmem:[%s254 + $0xd0] sm:$0xff]
        %v400 = vld [vmem:[%s254 + $0xd8] sm:$0xff]
        %v401 = vld [vmem:[%s254 + $0xe0] sm:$0xff]
        %v402 = vld [vmem:[%s254 + $0xe8] sm:$0xff]
        %v403 = vld [vmem:[%s254 + $0xf0] sm:$0xff]
        %v404 = vld [vmem:[%s254 + $0xf8] sm:$0xff]
        %v405 = vsub.f32 %v309, %v341
        %v406 = vsub.f32 %v310, %v342
        %v407 = vsub.f32 %v311, %v343
        %v408 = vsub.f32 %v312, %v344
        %v409 = vsub.f32 %v313, %v345
        %v410 = vsub.f32 %v314, %v346
        %v411 = vsub.f32 %v315, %v347
        %v412 = vsub.f32 %v316, %v348
        %v413 = vsub.f32 %v317, %v349
        %v414 = vsub.f32 %v318, %v350
        %v415 = vsub.f32 %v319, %v351
        %v416 = vsub.f32 %v320, %v352
        %v417 = vsub.f32 %v321, %v353
        %v418 = vsub.f32 %v322, %v354
        %v419 = vsub.f32 %v323, %v355
        %v420 = vsub.f32 %v324, %v356
        %v421 = vsub.f32 %v325, %v357
        %v422 = vsub.f32 %v326, %v358
        %v423 = vsub.f32 %v327, %v359
        %v424 = vsub.f32 %v328, %v360
        %v425 = vsub.f32 %v329, %v361
        %v426 = vsub.f32 %v330, %v362
        %v427 = vsub.f32 %v331, %v363
        %v428 = vsub.f32 %v332, %v364
        %v429 = vsub.f32 %v333, %v365
        %v430 = vsub.f32 %v334, %v366
        %v431 = vsub.f32 %v335, %v367
        %v432 = vsub.f32 %v336, %v368
        %v433 = vsub.f32 %v337, %v369
        %v434 = vsub.f32 %v338, %v370
        %v435 = vsub.f32 %v339, %v371
        %v436 = vsub.f32 %v340, %v372
        %v437 = vmul.f32 %v405, %v405
        %v438 = vmul.f32 %v406, %v406
        %v439 = vmul.f32 %v407, %v407
        %v440 = vmul.f32 %v408, %v408
        %v441 = vmul.f32 %v409, %v409
        %v442 = vmul.f32 %v410, %v410
        %v443 = vmul.f32 %v411, %v411
        %v444 = vmul.f32 %v412, %v412
        %v445 = vmul.f32 %v413, %v413
        %v446 = vmul.f32 %v414, %v414
        %v447 = vmul.f32 %v415, %v415
        %v448 = vmul.f32 %v416, %v416
        %v449 = vmul.f32 %v417, %v417
        %v450 = vmul.f32 %v418, %v418
        %v451 = vmul.f32 %v419, %v419
        %v452 = vmul.f32 %v420, %v420
        %v453 = vmul.f32 %v421, %v421
        %v454 = vmul.f32 %v422, %v422
        %v455 = vmul.f32 %v423, %v423
        %v456 = vmul.f32 %v424, %v424
        %v457 = vmul.f32 %v425, %v425
        %v458 = vmul.f32 %v426, %v426
        %v459 = vmul.f32 %v427, %v427
        %v460 = vmul.f32 %v428, %v428
        %v461 = vmul.f32 %v429, %v429
        %v462 = vmul.f32 %v430, %v430
        %v463 = vmul.f32 %v431, %v431
        %v464 = vmul.f32 %v432, %v432
        %v465 = vmul.f32 %v433, %v433
        %v466 = vmul.f32 %v434, %v434
        %v467 = vmul.f32 %v435, %v435
        %v468 = vmul.f32 %v436, %v436
        %v469 = vsub.f32 %v309, %v373
        %v470 = vsub.f32 %v310, %v374
        %v471 = vsub.f32 %v311, %v375
        %v472 = vsub.f32 %v312, %v376
        %v473 = vsub.f32 %v313, %v377
        %v474 = vsub.f32 %v314, %v378
        %v475 = vsub.f32 %v315, %v379
        %v476 = vsub.f32 %v316, %v380
        %v477 = vsub.f32 %v317, %v381
        %v478 = vsub.f32 %v318, %v382
        %v479 = vsub.f32 %v319, %v383
        %v480 = vsub.f32 %v320, %v384
        %v481 = vsub.f32 %v321, %v385
        %v482 = vsub.f32 %v322, %v386
        %v483 = vsub.f32 %v323, %v387
        %v484 = vsub.f32 %v324, %v388
        %v485 = vsub.f32 %v325, %v389
        %v486 = vsub.f32 %v326, %v390
        %v487 = vsub.f32 %v327, %v391
        %v488 = vsub.f32 %v328, %v392
        %v489 = vsub.f32 %v329, %v393
        %v490 = vsub.f32 %v330, %v394
        %v491 = vsub.f32 %v331, %v395
        %v492 = vsub.f32 %v332, %v396
        %v493 = vsub.f32 %v333, %v397
        %v494 = vsub.f32 %v334, %v398
        %v495 = vsub.f32 %v335, %v399
        %v496 = vsub.f32 %v336, %v400
        %v497 = vsub.f32 %v337, %v401
        %v498 = vsub.f32 %v338, %v402
        %v499 = vsub.f32 %v339, %v403
        %v500 = vsub.f32 %v340, %v404
        %v501 = vmul.f32 %v469, %v469
        %v502 = vmul.f32 %v470, %v470
        %v503 = vmul.f32 %v471, %v471
        %v504 = vmul.f32 %v472, %v472
        %v505 = vmul.f32 %v473, %v473
        %v506 = vmul.f32 %v474, %v474
        %v507 = vmul.f32 %v475, %v475
        %v508 = vmul.f32 %v476, %v476
        %v509 = vmul.f32 %v477, %v477
        %v510 = vmul.f32 %v478, %v478
        %v511 = vmul.f32 %v479, %v479
        %v512 = vmul.f32 %v480, %v480
        %v513 = vmul.f32 %v481, %v481
        %v514 = vmul.f32 %v482, %v482
        %v515 = vmul.f32 %v483, %v483
        %v516 = vmul.f32 %v484, %v484
        %v517 = vmul.f32 %v485, %v485
        %v518 = vmul.f32 %v486, %v486
        %v519 = vmul.f32 %v487, %v487
        %v520 = vmul.f32 %v488, %v488
        %v521 = vmul.f32 %v489, %v489
        %v522 = vmul.f32 %v490, %v490
        %v523 = vmul.f32 %v491, %v491
        %v524 = vmul.f32 %v492, %v492
        %v525 = vmul.f32 %v493, %v493
        %v526 = vmul.f32 %v494, %v494
        %v527 = vmul.f32 %v495, %v495
        %v528 = vmul.f32 %v496, %v496
        %v529 = vmul.f32 %v497, %v497
        %v530 = vmul.f32 %v498, %v498
        %v531 = vmul.f32 %v499, %v499
        %v532 = vmul.f32 %v500, %v500
        %v533 = vsub.f32 %v437, %v501
        %v534 = vsub.f32 %v438, %v502
        %v535 = vsub.f32 %v439, %v503
        %v536 = vsub.f32 %v440, %v504
        %v537 = vsub.f32 %v441, %v505
        %v538 = vsub.f32 %v442, %v506
        %v539 = vsub.f32 %v443, %v507
        %v540 = vsub.f32 %v444, %v508
        %v541 = vsub.f32 %v445, %v509
        %v542 = vsub.f32 %v446, %v510
        %v543 = vsub.f32 %v447, %v511
        %v544 = vsub.f32 %v448, %v512
        %v545 = vsub.f32 %v449, %v513
        %v546 = vsub.f32 %v450, %v514
        %v547 = vsub.f32 %v451, %v515
        %v548 = vsub.f32 %v452, %v516
        %v549 = vsub.f32 %v453, %v517
        %v550 = vsub.f32 %v454, %v518
        %v551 = vsub.f32 %v455, %v519
        %v552 = vsub.f32 %v456, %v520
        %v553 = vsub.f32 %v457, %v521
        %v554 = vsub.f32 %v458, %v522
        %v555 = vsub.f32 %v459, %v523
        %v556 = vsub.f32 %v460, %v524
        %v557 = vsub.f32 %v461, %v525
        %v558 = vsub.f32 %v462, %v526
        %v559 = vsub.f32 %v463, %v527
        %v560 = vsub.f32 %v464, %v528
        %v561 = vsub.f32 %v465, %v529
        %v562 = vsub.f32 %v466, %v530
        %v563 = vsub.f32 %v467, %v531
        %v564 = vsub.f32 %v468, %v532
        %v565 = vadd.f32 %v533, %v534
        %566 = vadd.xlane.f32.xlu0 %v565
        %v567 = vpop.xlane.xlu0 %566
        %v568 = vadd.f32 %v535, %v536
        %569 = vadd.xlane.f32.xlu0 %v568
        %v570 = vpop.xlane.xlu0 %569
        %v571 = vadd.f32 %v537, %v538
        %572 = vadd.xlane.f32.xlu0 %v571
        %v573 = vpop.xlane.xlu0 %572
        %v574 = vadd.f32 %v539, %v540
        %575 = vadd.xlane.f32.xlu0 %v574
        %v576 = vpop.xlane.xlu0 %575
        %v577 = vadd.f32 %v541, %v542
        %578 = vadd.xlane.f32.xlu0 %v577
        %v579 = vpop.xlane.xlu0 %578
        %v580 = vadd.f32 %v543, %v544
        %581 = vadd.xlane.f32.xlu0 %v580
        %v582 = vpop.xlane.xlu0 %581
        %v583 = vadd.f32 %v545, %v546
        %584 = vadd.xlane.f32.xlu0 %v583
        %v585 = vpop.xlane.xlu0 %584
        %v586 = vadd.f32 %v547, %v548
        %587 = vadd.xlane.f32.xlu0 %v586
        %v588 = vpop.xlane.xlu0 %587
        %v589 = vadd.f32 %v549, %v550
        %590 = vadd.xlane.f32.xlu0 %v589
        %v591 = vpop.xlane.xlu0 %590
        %v592 = vadd.f32 %v551, %v552
        %593 = vadd.xlane.f32.xlu0 %v592
        %v594 = vpop.xlane.xlu0 %593
        %v595 = vadd.f32 %v553, %v554
        %596 = vadd.xlane.f32.xlu0 %v595
        %v597 = vpop.xlane.xlu0 %596
        %v598 = vadd.f32 %v555, %v556
        %599 = vadd.xlane.f32.xlu0 %v598
        %v600 = vpop.xlane.xlu0 %599
        %v601 = vadd.f32 %v557, %v558
        %602 = vadd.xlane.f32.xlu0 %v601
        %v603 = vpop.xlane.xlu0 %602
        %v604 = vadd.f32 %v559, %v560
        %605 = vadd.xlane.f32.xlu0 %v604
        %v606 = vpop.xlane.xlu0 %605
        %v607 = vadd.f32 %v561, %v562
        %608 = vadd.xlane.f32.xlu0 %v607
        %v609 = vpop.xlane.xlu0 %608
        %v610 = vadd.f32 %v563, %v564
        %611 = vadd.xlane.f32.xlu0 %v610
        %v612 = vpop.xlane.xlu0 %611
        %v613 = vadd.f32 %v567, 1.0
        %v614 = vadd.f32 %v570, 1.0
        %v615 = vadd.f32 %v573, 1.0
        %v616 = vadd.f32 %v576, 1.0
        %v617 = vadd.f32 %v579, 1.0
        %v618 = vadd.f32 %v582, 1.0
        %v619 = vadd.f32 %v585, 1.0
        %v620 = vadd.f32 %v588, 1.0
        %v621 = vadd.f32 %v591, 1.0
        %v622 = vadd.f32 %v594, 1.0
        %v623 = vadd.f32 %v597, 1.0
        %v624 = vadd.f32 %v600, 1.0
        %v625 = vadd.f32 %v603, 1.0
        %v626 = vadd.f32 %v606, 1.0
        %v627 = vadd.f32 %v609, 1.0
        %v628 = vadd.f32 %v612, 1.0
        %v629 = vmax.f32 %v613, 0.0
        %v630 = vmax.f32 %v614, 0.0
        %v631 = vmax.f32 %v615, 0.0
        %v632 = vmax.f32 %v616, 0.0
        %v633 = vmax.f32 %v617, 0.0
        %v634 = vmax.f32 %v618, 0.0
        %v635 = vmax.f32 %v619, 0.0
        %v636 = vmax.f32 %v620, 0.0
        %v637 = vmax.f32 %v621, 0.0
        %v638 = vmax.f32 %v622, 0.0
        %v639 = vmax.f32 %v623, 0.0
        %v640 = vmax.f32 %v624, 0.0
        %v641 = vmax.f32 %v625, 0.0
        %v642 = vmax.f32 %v626, 0.0
        %v643 = vmax.f32 %v627, 0.0
        %v644 = vmax.f32 %v628, 0.0
        %v645 = vlaneseq
        %v646 = vshrl.u32 %v645, 7
        %v647 = vadd.s32 %v646, 8
        %v648 = vadd.s32 %v646, 16
        %v649 = vadd.s32 %v646, 24
        %v650 = vadd.s32 %v646, 32
        %v651 = vadd.s32 %v646, 40
        %v652 = vadd.s32 %v646, 48
        %v653 = vadd.s32 %v646, 56
        %v654 = vadd.s32 %v646, 64
        %v655 = vadd.s32 %v646, 72
        %v656 = vadd.s32 %v646, 80
        %v657 = vadd.s32 %v646, 88
        %v658 = vadd.s32 %v646, 96
        %v659 = vadd.s32 %v646, 104
        %v660 = vadd.s32 %v646, 112
        %v661 = vadd.s32 %v646, 120
        %s662 = smul.u32 %s20, 128
        %v663 = vstv %s662
        %v664 = vadd.s32 %v646, %v663
        %v665 = vadd.s32 %v647, %v663
        %v666 = vadd.s32 %v648, %v663
        %v667 = vadd.s32 %v649, %v663
        %v668 = vadd.s32 %v650, %v663
        %v669 = vadd.s32 %v651, %v663
        %v670 = vadd.s32 %v652, %v663
        %v671 = vadd.s32 %v653, %v663
        %v672 = vadd.s32 %v654, %v663
        %v673 = vadd.s32 %v655, %v663
        %v674 = vadd.s32 %v656, %v663
        %v675 = vadd.s32 %v657, %v663
        %v676 = vadd.s32 %v658, %v663
        %v677 = vadd.s32 %v659, %v663
        %v678 = vadd.s32 %v660, %v663
        %v679 = vadd.s32 %v661, %v663
        %vm680 = vcmp.lt.s32.totalorder %v664, 300
        %vm681 = vcmp.lt.s32.totalorder %v665, 300
        %vm682 = vcmp.lt.s32.totalorder %v666, 300
        %vm683 = vcmp.lt.s32.totalorder %v667, 300
        %vm684 = vcmp.lt.s32.totalorder %v668, 300
        %vm685 = vcmp.lt.s32.totalorder %v669, 300
        %vm686 = vcmp.lt.s32.totalorder %v670, 300
        %vm687 = vcmp.lt.s32.totalorder %v671, 300
        %vm688 = vcmp.lt.s32.totalorder %v672, 300
        %vm689 = vcmp.lt.s32.totalorder %v673, 300
        %vm690 = vcmp.lt.s32.totalorder %v674, 300
        %vm691 = vcmp.lt.s32.totalorder %v675, 300
        %vm692 = vcmp.lt.s32.totalorder %v676, 300
        %vm693 = vcmp.lt.s32.totalorder %v677, 300
        %vm694 = vcmp.lt.s32.totalorder %v678, 300
        %vm695 = vcmp.lt.s32.totalorder %v679, 300
        %v696 = vsel %vm680, %v629, 0.0
        %v697 = vsel %vm681, %v630, 0.0
        %v698 = vsel %vm682, %v631, 0.0
        %v699 = vsel %vm683, %v632, 0.0
        %v700 = vsel %vm684, %v633, 0.0
        %v701 = vsel %vm685, %v634, 0.0
        %v702 = vsel %vm686, %v635, 0.0
        %v703 = vsel %vm687, %v636, 0.0
        %v704 = vsel %vm688, %v637, 0.0
        %v705 = vsel %vm689, %v638, 0.0
        %v706 = vsel %vm690, %v639, 0.0
        %v707 = vsel %vm691, %v640, 0.0
        %v708 = vsel %vm692, %v641, 0.0
        %v709 = vsel %vm693, %v642, 0.0
        %v710 = vsel %vm694, %v643, 0.0
        %v711 = vsel %vm695, %v644, 0.0
        %vm712 = vcmask 7168
        %713 = vst.msk [vmem:[%s285] sm:$0xff] %vm712, %v696
        %714 = vst.msk [vmem:[%s285 + $0x8] sm:$0xff] %vm712, %v697
        %715 = vst.msk [vmem:[%s285 + $0x10] sm:$0xff] %vm712, %v698
        %716 = vst.msk [vmem:[%s285 + $0x18] sm:$0xff] %vm712, %v699
        %717 = vst.msk [vmem:[%s285 + $0x20] sm:$0xff] %vm712, %v700
        %718 = vst.msk [vmem:[%s285 + $0x28] sm:$0xff] %vm712, %v701
        %719 = vst.msk [vmem:[%s285 + $0x30] sm:$0xff] %vm712, %v702
        %720 = vst.msk [vmem:[%s285 + $0x38] sm:$0xff] %vm712, %v703
        %721 = vst.msk [vmem:[%s285 + $0x40] sm:$0xff] %vm712, %v704
        %722 = vst.msk [vmem:[%s285 + $0x48] sm:$0xff] %vm712, %v705
        %723 = vst.msk [vmem:[%s285 + $0x50] sm:$0xff] %vm712, %v706
        %724 = vst.msk [vmem:[%s285 + $0x58] sm:$0xff] %vm712, %v707
        %725 = vst.msk [vmem:[%s285 + $0x60] sm:$0xff] %vm712, %v708
        %726 = vst.msk [vmem:[%s285 + $0x68] sm:$0xff] %vm712, %v709
        %727 = vst.msk [vmem:[%s285 + $0x70] sm:$0xff] %vm712, %v710
        %728 = vst.msk [vmem:[%s285 + $0x78] sm:$0xff] %vm712, %v711
        %s729 = sand.u32 %s106, 1
        %s730 = sand.u32 %s106, 1
        %s731 = smul.addr %s730, 128
        %s732 = scalar_lea.vmem [#allocation7], %s731
        // Predicated region
        $region45: #{tpu_custom_call.1} parent=31 // pred_check
          %p733 = pneg %p116
        $region46: #{tpu_custom_call.1} parent=31 // pred_check_branch
          %735 = sbr.rel (%p733) target = $region48
        $region47: #{tpu_custom_call.1} parent=31 // pred_region
          %s736 = smul.u32 16, %s20
          %s737 = ssub.s32 38, %s736
          %p738 = scmp.lt.s32.totalorder %s737, 16
          %s739 = scalar_select %p738, %s737, 16
          %s740 = smul.u32 128, %s739
          %p741 = scmp.ne.s32.totalorder 0, %s740
          %s742 = smul.addr %s736, 8
          %s743 = scalar_lea.vmem %s3, %s742
          // Predicated region
          $region49: #{tpu_custom_call.1} parent=47 // pred_check
            %p744 = pneg %p741
          $region50: #{tpu_custom_call.1} parent=47 // pred_check_branch
            %746 = sbr.rel (%p744) target = $region52
          $region51: #{tpu_custom_call.1} parent=47 // pred_region
            // Predicated region
            $region53: #{tpu_custom_call.1} parent=51 // pred_check
              _
            $region54: #{tpu_custom_call.1} parent=51 // pred_check_branch
              %748 = sbr.rel (0) target = $region56
            $region55: #{tpu_custom_call.1} parent=51 // pred_region
              // Predicated region
              $region75: #{tpu_custom_call.1} parent=55 // pred_check
                _
              $region76: #{tpu_custom_call.1} parent=55 // pred_check_branch
                %827 = sbr.rel (0) target = $region78
              $region77: #{tpu_custom_call.1} parent=55 // pred_region
                %s828 = sshrl.u32 %s739, 4
                // While loop
                $region79: #{tpu_custom_call.1} parent=77 // loop_pre_header
                  _
                $region80: #{tpu_custom_call.1} parent=77 // loop_header
                  %s830 = sphi 0, %s832
                  %p831 = scmp.ge.s32.totalorder %s830, %s828
                  %s835 = sphi 0, %s872
                  %s836 = sphi %s732, %s875
                  %s837 = sphi %s743, %s876
                $region81: #{tpu_custom_call.1} parent=77 // loop_header_branch
                  %834 = sbr.rel (%p831) target = $region85
                $region82: #{tpu_custom_call.1} parent=77 // loop_body
                  %v838 = vld [vmem:[%s836] sm:$0xff]
                  %839 = vst [vmem:[%s837] sm:$0xff] %v838
                  %v840 = vld [vmem:[%s836 + $0x8] sm:$0xff]
                  %841 = vst [vmem:[%s837 + $0x8] sm:$0xff] %v840
                  %v842 = vld [vmem:[%s836 + $0x10] sm:$0xff]
                  %843 = vst [vmem:[%s837 + $0x10] sm:$0xff] %v842
                  %v844 = vld [vmem:[%s836 + $0x18] sm:$0xff]
                  %845 = vst [vmem:[%s837 + $0x18] sm:$0xff] %v844
                  %v846 = vld [vmem:[%s836 + $0x20] sm:$0xff]
                  %847 = vst [vmem:[%s837 + $0x20] sm:$0xff] %v846
                  %v848 = vld [vmem:[%s836 + $0x28] sm:$0xff]
                  %849 = vst [vmem:[%s837 + $0x28] sm:$0xff] %v848
                  %v850 = vld [vmem:[%s836 + $0x30] sm:$0xff]
                  %851 = vst [vmem:[%s837 + $0x30] sm:$0xff] %v850
                  %v852 = vld [vmem:[%s836 + $0x38] sm:$0xff]
                  %853 = vst [vmem:[%s837 + $0x38] sm:$0xff] %v852
                  %v854 = vld [vmem:[%s836 + $0x40] sm:$0xff]
                  %855 = vst [vmem:[%s837 + $0x40] sm:$0xff] %v854
                  %v856 = vld [vmem:[%s836 + $0x48] sm:$0xff]
                  %857 = vst [vmem:[%s837 + $0x48] sm:$0xff] %v856
                  %v858 = vld [vmem:[%s836 + $0x50] sm:$0xff]
                  %859 = vst [vmem:[%s837 + $0x50] sm:$0xff] %v858
                  %v860 = vld [vmem:[%s836 + $0x58] sm:$0xff]
                  %861 = vst [vmem:[%s837 + $0x58] sm:$0xff] %v860
                  %v862 = vld [vmem:[%s836 + $0x60] sm:$0xff]
                  %863 = vst [vmem:[%s837 + $0x60] sm:$0xff] %v862
                  %v864 = vld [vmem:[%s836 + $0x68] sm:$0xff]
                  %865 = vst [vmem:[%s837 + $0x68] sm:$0xff] %v864
                  %v866 = vld [vmem:[%s836 + $0x70] sm:$0xff]
                  %867 = vst [vmem:[%s837 + $0x70] sm:$0xff] %v866
                  %v868 = vld [vmem:[%s836 + $0x78] sm:$0xff]
                  %869 = vst [vmem:[%s837 + $0x78] sm:$0xff] %v868
                  %s870 = sadd.s32 1, %s835
                  %p871 = scmp.ge.s32.totalorder %s870, %s828
                  %s872 = scalar_select %p871, 0, %s870
                  %s873 = smul.u32 %s872, 128
                  %s874 = smul.u32 %s872, 128
                  %s875 = scalar_lea.vmem %s732, %s873 [#allocation7]
                  %s876 = scalar_lea.vmem %s743, %s874
                $region83: #{tpu_custom_call.1} parent=77 // loop_footer
                  %s832 = sadd.s32 %s830, 1
                $region84: #{tpu_custom_call.1} parent=77 // loop_footer_branch
                  %829 = sbr.rel target = $region80
                $region85: #{tpu_custom_call.1} parent=77 // loop_exit
                  _
                %s877 = sshrl.u32 %s739, 4
                %s878 = sand.u32 %s739, 15
                %s879 = smul.u32 %s877, 16
                %s880 = smul.u32 8, %s879
                %s881 = scalar_lea.vmem %s732, %s880 [#allocation7]
                %s882 = smul.u32 8, %s879
                %s883 = scalar_lea.vmem %s743, %s882
                // While loop
                $region86: #{tpu_custom_call.1} parent=77 // loop_pre_header
                  _
                $region87: #{tpu_custom_call.1} parent=77 // loop_header
                  %s885 = sphi 0, %s887
                  %p886 = scmp.ge.s32.totalorder %s885, %s878
                  %s890 = sphi 0, %s897
                  %s891 = sphi %s881, %s900
                  %s892 = sphi %s883, %s901
                $region88: #{tpu_custom_call.1} parent=77 // loop_header_branch
                  %889 = sbr.rel (%p886) target = $region92
                $region89: #{tpu_custom_call.1} parent=77 // loop_body
                  %v893 = vld [vmem:[%s891] sm:$0xff]
                  %894 = vst [vmem:[%s892] sm:$0xff] %v893
                  %s895 = sadd.s32 1, %s890
                  %p896 = scmp.ge.s32.totalorder %s895, %s878
                  %s897 = scalar_select %p896, 0, %s895
                  %s898 = smul.u32 %s897, 8
                  %s899 = smul.u32 %s897, 8
                  %s900 = scalar_lea.vmem %s881, %s898 [#allocation7]
                  %s901 = scalar_lea.vmem %s883, %s899
                $region90: #{tpu_custom_call.1} parent=77 // loop_footer
                  %s887 = sadd.s32 %s885, 1
                $region91: #{tpu_custom_call.1} parent=77 // loop_footer_branch
                  %884 = sbr.rel target = $region87
                $region92: #{tpu_custom_call.1} parent=77 // loop_exit
                  _
              $region78: #{tpu_custom_call.1} parent=55 // pred_fallthru
                _
              // Predicated region
              $region93: #{tpu_custom_call.1} parent=55 // pred_check
                _
              $region94: #{tpu_custom_call.1} parent=55 // pred_check_branch
                %903 = sbr.rel target = $region96
              $region95: #{tpu_custom_call.1} parent=55 // pred_region
                _
              $region96: #{tpu_custom_call.1} parent=55 // pred_fallthru
                _
            $region56: #{tpu_custom_call.1} parent=51 // pred_fallthru
              _
            // Predicated region
            $region57: #{tpu_custom_call.1} parent=51 // pred_check
              _
            $region58: #{tpu_custom_call.1} parent=51 // pred_check_branch
              %750 = sbr.rel target = $region60
            $region59: #{tpu_custom_call.1} parent=51 // pred_region
              %s752 = sshrl.u32 %s739, 4
              // While loop
              $region61: #{tpu_custom_call.1} parent=59 // loop_pre_header
                _
              $region62: #{tpu_custom_call.1} parent=59 // loop_header
                %s754 = sphi 0, %s756
                %p755 = scmp.ge.s32.totalorder %s754, %s752
                %s759 = sphi 0, %s796
                %s760 = sphi %s732, %s799
                %s761 = sphi %s743, %s800
              $region63: #{tpu_custom_call.1} parent=59 // loop_header_branch
                %758 = sbr.rel (%p755) target = $region67
              $region64: #{tpu_custom_call.1} parent=59 // loop_body
                %v762 = vld [vmem:[%s760] sm:$0xff]
                %763 = vst [vmem:[%s761] sm:$0xff] %v762
                %v764 = vld [vmem:[%s760 + $0x8] sm:$0xff]
                %765 = vst [vmem:[%s761 + $0x8] sm:$0xff] %v764
                %v766 = vld [vmem:[%s760 + $0x10] sm:$0xff]
                %767 = vst [vmem:[%s761 + $0x10] sm:$0xff] %v766
                %v768 = vld [vmem:[%s760 + $0x18] sm:$0xff]
                %769 = vst [vmem:[%s761 + $0x18] sm:$0xff] %v768
                %v770 = vld [vmem:[%s760 + $0x20] sm:$0xff]
                %771 = vst [vmem:[%s761 + $0x20] sm:$0xff] %v770
                %v772 = vld [vmem:[%s760 + $0x28] sm:$0xff]
                %773 = vst [vmem:[%s761 + $0x28] sm:$0xff] %v772
                %v774 = vld [vmem:[%s760 + $0x30] sm:$0xff]
                %775 = vst [vmem:[%s761 + $0x30] sm:$0xff] %v774
                %v776 = vld [vmem:[%s760 + $0x38] sm:$0xff]
                %777 = vst [vmem:[%s761 + $0x38] sm:$0xff] %v776
                %v778 = vld [vmem:[%s760 + $0x40] sm:$0xff]
                %779 = vst [vmem:[%s761 + $0x40] sm:$0xff] %v778
                %v780 = vld [vmem:[%s760 + $0x48] sm:$0xff]
                %781 = vst [vmem:[%s761 + $0x48] sm:$0xff] %v780
                %v782 = vld [vmem:[%s760 + $0x50] sm:$0xff]
                %783 = vst [vmem:[%s761 + $0x50] sm:$0xff] %v782
                %v784 = vld [vmem:[%s760 + $0x58] sm:$0xff]
                %785 = vst [vmem:[%s761 + $0x58] sm:$0xff] %v784
                %v786 = vld [vmem:[%s760 + $0x60] sm:$0xff]
                %787 = vst [vmem:[%s761 + $0x60] sm:$0xff] %v786
                %v788 = vld [vmem:[%s760 + $0x68] sm:$0xff]
                %789 = vst [vmem:[%s761 + $0x68] sm:$0xff] %v788
                %v790 = vld [vmem:[%s760 + $0x70] sm:$0xff]
                %791 = vst [vmem:[%s761 + $0x70] sm:$0xff] %v790
                %v792 = vld [vmem:[%s760 + $0x78] sm:$0xff]
                %793 = vst [vmem:[%s761 + $0x78] sm:$0xff] %v792
                %s794 = sadd.s32 1, %s759
                %p795 = scmp.ge.s32.totalorder %s794, %s752
                %s796 = scalar_select %p795, 0, %s794
                %s797 = smul.u32 %s796, 128
                %s798 = smul.u32 %s796, 128
                %s799 = scalar_lea.vmem %s732, %s797 [#allocation7]
                %s800 = scalar_lea.vmem %s743, %s798
              $region65: #{tpu_custom_call.1} parent=59 // loop_footer
                %s756 = sadd.s32 %s754, 1
              $region66: #{tpu_custom_call.1} parent=59 // loop_footer_branch
                %753 = sbr.rel target = $region62
              $region67: #{tpu_custom_call.1} parent=59 // loop_exit
                _
              %s801 = sshrl.u32 %s739, 4
              %s802 = sand.u32 %s739, 15
              %s803 = smul.u32 %s801, 16
              %s804 = smul.u32 8, %s803
              %s805 = scalar_lea.vmem %s732, %s804 [#allocation7]
              %s806 = smul.u32 8, %s803
              %s807 = scalar_lea.vmem %s743, %s806
              // While loop
              $region68: #{tpu_custom_call.1} parent=59 // loop_pre_header
                _
              $region69: #{tpu_custom_call.1} parent=59 // loop_header
                %s809 = sphi 0, %s811
                %p810 = scmp.ge.s32.totalorder %s809, %s802
                %s814 = sphi 0, %s821
                %s815 = sphi %s805, %s824
                %s816 = sphi %s807, %s825
              $region70: #{tpu_custom_call.1} parent=59 // loop_header_branch
                %813 = sbr.rel (%p810) target = $region74
              $region71: #{tpu_custom_call.1} parent=59 // loop_body
                %v817 = vld [vmem:[%s815] sm:$0xff]
                %818 = vst [vmem:[%s816] sm:$0xff] %v817
                %s819 = sadd.s32 1, %s814
                %p820 = scmp.ge.s32.totalorder %s819, %s802
                %s821 = scalar_select %p820, 0, %s819
                %s822 = smul.u32 %s821, 8
                %s823 = smul.u32 %s821, 8
                %s824 = scalar_lea.vmem %s805, %s822 [#allocation7]
                %s825 = scalar_lea.vmem %s807, %s823
              $region72: #{tpu_custom_call.1} parent=59 // loop_footer
                %s811 = sadd.s32 %s809, 1
              $region73: #{tpu_custom_call.1} parent=59 // loop_footer_branch
                %808 = sbr.rel target = $region69
              $region74: #{tpu_custom_call.1} parent=59 // loop_exit
                _
            $region60: #{tpu_custom_call.1} parent=51 // pred_fallthru
              _
          $region52: #{tpu_custom_call.1} parent=47 // pred_fallthru
            _
          %904 = vnop
        $region48: #{tpu_custom_call.1} parent=31 // pred_fallthru
          _
      $region32: #{tpu_custom_call.1} parent=5 // pred_fallthru
        _
      %p905 = scmp.le.s32.totalorder 2, %s15
      // Predicated region
      $region97: #{tpu_custom_call.1} parent=5 // pred_check
        %p906 = pneg %p905
      $region98: #{tpu_custom_call.1} parent=5 // pred_check_branch
        %908 = sbr.rel (%p906) target = $region100
      $region99: #{tpu_custom_call.1} parent=5 // pred_region
        %s909 = ssub.s32 %s15, 2
        // Predicated region
        $region101: #{tpu_custom_call.1} parent=99 // pred_check
          %p910 = pneg %p122
        $region102: #{tpu_custom_call.1} parent=99 // pred_check_branch
          %912 = sbr.rel (%p910) target = $region104
        $region103: #{tpu_custom_call.1} parent=99 // pred_region
          %s913 = sand.u32 %s107, 1
          %s914 = sand.u32 %s107, 1
          %s915 = smul.addr %s914, 128
          %s916 = scalar_lea.vmem [#allocation7], %s915
        $region104: #{tpu_custom_call.1} parent=99 // pred_fallthru
          _
      $region100: #{tpu_custom_call.1} parent=5 // pred_fallthru
        _
    $region6: #{tpu_custom_call.1} parent=1 // loop_footer
      %s19 = sadd.s32 1, %s15
    $region7: #{tpu_custom_call.1} parent=1 // loop_footer_branch
      %14 = sbr.rel target = $region3
    $region8: #{tpu_custom_call.1} parent=1 // loop_exit
      _
    %917 = vsyncpa [#allocation3], 1
    %s918 = scalar_lea.sflag [#allocation3], 1
    %919 = vsyncpa %s918, 1
    %920 = vsyncpa [#allocation5], 1
    %s921 = scalar_lea.sflag [#allocation5], 1
    %922 = vsyncpa %s921, 1

</llo_original>
